<compile_context>
chip_gen: v7x
topology: tpu7x:2x2x1
jax: 0.10.0
libtpu: 0.0.40
codegen_flags: <defaults>
</compile_context>

<pallas_src>
import functools

import jax
import jax.numpy as jnp
from jax.experimental import pallas as pl
from jax.experimental.pallas import tpu as pltpu


# ------------------------------ helpers --------------------------------------

def _round_up(x, m):
    return (x + m - 1) // m * m


def _pad2d(a, rows, cols, dtype=None):
    if dtype is not None and a.dtype != dtype:
        a = a.astype(dtype)
    r, c = a.shape
    if (r, c) != (rows, cols):
        a = jnp.pad(a, ((0, rows - r), (0, cols - c)))
    return a


def _pick_tile(dim_padded, max_tile, align):
    """Near-divisor tile: largest tile <= max_tile (multiple of `align`) such
    that rounding dim up to the tile inflates it as little as possible."""
    n_blocks = pl.cdiv(dim_padded, max_tile)
    tile = _round_up(pl.cdiv(dim_padded, n_blocks), align)
    return tile, _round_up(dim_padded, tile)


def _pick_dividing_tile(dim, max_tile, align=128):
    """`dim` is a multiple of `align`; return the largest multiple of `align`
    <= max_tile that divides `dim` exactly (pre-packed arrays never re-pad)."""
    t = min(max_tile, dim)
    t = (t // align) * align
    while dim % t:
        t -= align
    return t


# --------------------------- parameter packing --------------------------------

def pack_linear(w, b, compute_dtype=jnp.bfloat16):
    """One-time pack of nn.Linear params: cast weight to the MXU compute dtype
    and zero-pad both operands to lane-dense multiples of 128."""
    K, N = w.shape
    assert b.shape == (N,)
    Kp = _round_up(K, 128)
    Np = _round_up(N, 128)
    return {
        'w': _pad2d(w, Kp, Np, compute_dtype),          # (Kp, Np) bf16
        'b': _pad2d(b.reshape(1, N), 1, Np, jnp.float32),  # (1, Np) f32
        'K': K, 'N': N,
    }


# ------------------------------ kernels ---------------------------------------

def _linear_kernel(x_ref, w_ref, b_ref, o_ref, acc_ref, *, relu):
    """One (TM, TN) output tile; accumulates over the K grid axis.
    Accumulator is initialized with the broadcast bias at k == 0."""
    k = pl.program_id(2)

    @pl.when(k == 0)
    def _init():
        acc_ref[...] = jnp.broadcast_to(
            b_ref[...].astype(jnp.float32), acc_ref.shape)

    x = x_ref[...]
    if x.dtype != w_ref.dtype:        # static at trace time
        x = x.astype(w_ref.dtype)     # in-kernel cast: no extra HBM pass
    acc_ref[...] += jnp.dot(x, w_ref[...], preferred_element_type=jnp.float32)

    @pl.when(k == pl.num_programs(2) - 1)
    def _finalize():
        y = acc_ref[...]
        if relu:
            y = jnp.maximum(y, 0.0)
        o_ref[...] = y.astype(o_ref.dtype)


def _fused_classifier_kernel(x_ref, w1_ref, b1_ref, w2_ref, b2_ref,
                             o_ref, acc_ref):
    """relu(x @ W1 + b1) @ W2 + b2 in one kernel.  W2/b2 are VMEM-resident and
    applied in the finalize of the first matmul's K reduction."""
    k = pl.program_id(1)

    @pl.when(k == 0)
    def _init():
        acc_ref[...] = jnp.broadcast_to(
            b1_ref[...].astype(jnp.float32), acc_ref.shape)

    x = x_ref[...]
    if x.dtype != w1_ref.dtype:
        x = x.astype(w1_ref.dtype)
    acc_ref[...] += jnp.dot(x, w1_ref[...], preferred_element_type=jnp.float32)

    @pl.when(k == pl.num_programs(1) - 1)
    def _finalize():
        feats = jnp.maximum(acc_ref[...], 0.0).astype(w2_ref.dtype)
        logits = jnp.dot(feats, w2_ref[...],
                         preferred_element_type=jnp.float32) + b2_ref[...]
        o_ref[...] = logits.astype(o_ref.dtype)


# ------------------------------ wrappers ---------------------------------------

_VMEM_LIMIT = 48 * 1024 * 1024   # <= ~48 MiB: safe on v7x (64 MiB VMEM/TC)


def pallas_linear_packed(x, packed, *, relu=False, out_dtype=jnp.float32,
                         tm_max=256, tn_max=256, tk_max=1024):
    """y = x @ W + b (optional ReLU) with pre-packed (bf16, padded) weights."""
    M, K = x.shape
    assert K == packed['K']
    Kp, Np = packed['w'].shape
    N = packed['N']

    tm, Mp = _pick_tile(_round_up(M, 16), tm_max, 16)
    tn = _pick_dividing_tile(Np, tn_max)
    tk = _pick_dividing_tile(Kp, tk_max)
    grid = (Mp // tm, Np // tn, Kp // tk)

    # Pre-cast x to bf16 only when each x tile is reused across >= 2 N blocks;
    # otherwise stream x in its native dtype and cast inside the kernel.
    x_dtype = packed['w'].dtype if grid[1] >= 2 else x.dtype
    xb = _pad2d(x, Mp, Kp, x_dtype)

    kernel = functools.partial(_linear_kernel, relu=relu)
    out = pl.pallas_call(
        kernel,
        out_shape=jax.ShapeDtypeStruct((Mp, Np), out_dtype),
        grid_spec=pltpu.PrefetchScalarGridSpec(
            num_scalar_prefetch=0,
            grid=grid,
            in_specs=[
                pl.BlockSpec((tm, tk), lambda i, j, k: (i, k)),
                pl.BlockSpec((tk, tn), lambda i, j, k: (k, j)),
                pl.BlockSpec((1, tn), lambda i, j, k: (0, j)),
            ],
            out_specs=pl.BlockSpec((tm, tn), lambda i, j, k: (i, j)),
            scratch_shapes=[pltpu.VMEM((tm, tn), jnp.float32)],
        ),
        compiler_params=pltpu.CompilerParams(
            dimension_semantics=("parallel", "parallel", "arbitrary"),
            vmem_limit_bytes=_VMEM_LIMIT,
        ),
    )(xb, packed['w'], packed['b'])

    return out[:M, :N]


def fused_classifier_forward(x_nchw, params, *, out_dtype=jnp.float32,
                             tm_max=256, tk_max=1024):
    """Fused flatten -> Linear -> ReLU -> Linear (fc) in ONE pallas_call."""
    emb, fc = params['embed'], params['fc']
    n = x_nchw.shape[0]
    x = x_nchw.reshape(n, -1)
    M, K = x.shape
    assert K == emb['K'] and emb['N'] == fc['K']

    Kp, Ep = emb['w'].shape
    Ep2, Cp = fc['w'].shape
    assert Ep2 == Ep                      # both padded to multiples of 128
    assert Ep <= 1024 and Cp <= 1024      # W2/b2 held whole in VMEM

    tm, Mp = _pick_tile(_round_up(M, 16), tm_max, 16)
    tk = _pick_dividing_tile(Kp, tk_max)
    grid = (Mp // tm, Kp // tk)

    xb = _pad2d(x, Mp, Kp, x.dtype)       # native dtype; cast inside kernel

    out = pl.pallas_call(
        _fused_classifier_kernel,
        out_shape=jax.ShapeDtypeStruct((Mp, Cp), out_dtype),
        grid_spec=pltpu.PrefetchScalarGridSpec(
            num_scalar_prefetch=0,
            grid=grid,
            in_specs=[
                pl.BlockSpec((tm, tk), lambda i, k: (i, k)),
                pl.BlockSpec((tk, Ep), lambda i, k: (k, 0)),
                pl.BlockSpec((1, Ep), lambda i, k: (0, 0)),
                pl.BlockSpec((Ep, Cp), lambda i, k: (0, 0)),
                pl.BlockSpec((1, Cp), lambda i, k: (0, 0)),
            ],
            out_specs=pl.BlockSpec((tm, Cp), lambda i, k: (i, 0)),
            scratch_shapes=[pltpu.VMEM((tm, Ep), jnp.float32)],
        ),
        compiler_params=pltpu.CompilerParams(
            dimension_semantics=("parallel", "arbitrary"),
            vmem_limit_bytes=_VMEM_LIMIT,
        ),
    )(xb, emb['w'], emb['b'], fc['w'], fc['b'])

    return out[:M, :fc['N']]


# --------------------------- LinearClassifier ---------------------------------

def default_embedding_net(x_nchw, params):
    """Stand-in embedding net: flatten + Linear + ReLU (same Pallas kernel).
    Emits bf16 features so the fc stage consumes them without a re-cast pass."""
    # TODO(synk): the real embedding_net (ResNet-18 backbone) is an external
    # pluggable nn.Module; it is not re-implemented here.
    n = x_nchw.shape[0]
    x_flat = x_nchw.reshape(n, -1)
    return pallas_linear_packed(x_flat, params['embed'], relu=True,
                                out_dtype=jnp.bfloat16)


def linear_classifier_forward(x, params, embedding_net=None):
    """features = embedding_net(x); return fc(features).

    With the built-in flatten+Linear+ReLU embedding (embedding_net=None) the
    two linear layers are fused into a single kernel; a user-supplied
    embedding_net runs as-is and only the fc head runs in Pallas."""
    if embedding_net is None:
        return fused_classifier_forward(x, params)
    features = embedding_net(x, params)
    return pallas_linear_packed(features, params['fc'], relu=False)


# ------------------------------- main ------------------------------------------

if __name__ == "__main__":
    key = jax.random.PRNGKey(0)
    kx, ke1, ke2, kf1, kf2, kx2, kw2, kb2 = jax.random.split(key, 8)

    def uinit(k, shape, fan_in):
        bound = 1.0 / (fan_in ** 0.5)
        return jax.random.uniform(k, shape, jnp.float32, -bound, bound)

    # ---- Config A: full LinearClassifier forward on an image batch ----------
    N, C, H, W = 2, 4, 16, 16
    embedding_size, n_classes = 32, 10
    in_feat = C * H * W

    x = jax.random.normal(kx, (N, C, H, W), jnp.float32)
    w_embed = uinit(ke1, (in_feat, embedding_size), in_feat)
    b_embed = uinit(ke2, (embedding_size,), in_feat)
    w_fc = uinit(kf1, (embedding_size, n_classes), embedding_size)
    b_fc = uinit(kf2, (n_classes,), embedding_size)

    # One-time parameter packing (cast + pad), outside the forward pass.
    params = {
        'embed': pack_linear(w_embed, b_embed),
        'fc': pack_linear(w_fc, b_fc),
    }

    feats_ref = jnp.maximum(x.reshape(N, -1) @ w_embed + b_embed, 0.0)
    logits_ref = feats_ref @ w_fc + b_fc

    # Fused single-kernel classifier path.
    logits = linear_classifier_forward(x, params)
    jax.block_until_ready(logits)
    assert logits.shape == (N, n_classes)
    assert bool(jnp.allclose(logits, logits_ref, atol=5e-2, rtol=5e-2)), \
        "fused classifier output mismatch"

    # Unfused path (external-embedding style): embedding kernel then fc kernel.
    logits_u = linear_classifier_forward(x, params,
                                         embedding_net=default_embedding_net)
    jax.block_until_ready(logits_u)
    assert bool(jnp.allclose(logits_u, logits_ref, atol=5e-2, rtol=5e-2)), \
        "unfused classifier output mismatch"

    # ---- Config B: fc alone on a larger feature batch -----------------------
    # Exercises a multi-tile grid (2-way M split, padded K/N, single K step).
    M2, K2, N2 = 384, 1000, 136
    x2 = jax.random.normal(kx2, (M2, K2), jnp.float32)
    w2 = uinit(kw2, (K2, N2), K2)
    b2 = uinit(kb2, (N2,), K2)
    fc2 = pack_linear(w2, b2)

    y2 = pallas_linear_packed(x2, fc2)
    jax.block_until_ready(y2)
    y2_ref = x2 @ w2 + b2
    assert y2.shape == (M2, N2)
    assert bool(jnp.allclose(y2, y2_ref, atol=5e-2, rtol=5e-2)), "fc mismatch"

    print("KERNEL_OK")
</pallas_src>

<mosaic_0001>
module attributes {stable_mosaic.version = 11 : i64} {
  func.func @_fused_classifier_kernel(%arg0: i32, %arg1: i32, %arg2: memref<16x1024xf32, #tpu.memory_space<vmem>>, %arg3: memref<1024x128xbf16, #tpu.memory_space<vmem>>, %arg4: memref<1x128xf32, #tpu.memory_space<vmem>>, %arg5: memref<128x128xbf16, #tpu.memory_space<vmem>>, %arg6: memref<1x128xf32, #tpu.memory_space<vmem>>, %arg7: memref<16x128xf32, #tpu.memory_space<vmem>>, %arg8: memref<16x128xf32, #tpu.memory_space<vmem>>) attributes {dimension_semantics = [#tpu.dimension_semantics<parallel>, #tpu.dimension_semantics<arbitrary>], iteration_bounds = array<i64: 1, 1>, scalar_prefetch = 0 : i64, scratch_operands = 1 : i64, tpu.core_type = #tpu.core_type<tc>, window_params = [{transform_indices = @transform_0, window_bounds = array<i64: 16, 1024>}, {transform_indices = @transform_1, window_bounds = array<i64: 1024, 128>}, {pipeline_mode = #tpu.pipeline_mode<synchronous>, transform_indices = @transform_2, window_bounds = array<i64: 1, 128>}, {pipeline_mode = #tpu.pipeline_mode<synchronous>, transform_indices = @transform_3, window_bounds = array<i64: 128, 128>}, {pipeline_mode = #tpu.pipeline_mode<synchronous>, transform_indices = @transform_4, window_bounds = array<i64: 1, 128>}, {transform_indices = @transform_5, window_bounds = array<i64: 16, 128>}]} {
    %c0_i32 = arith.constant 0 : i32
    %0 = arith.cmpi eq, %arg1, %c0_i32 : i32
    %1 = arith.extui %0 : i1 to i32
    %c0_i32_0 = arith.constant 0 : i32
    %2 = arith.cmpi ne, %1, %c0_i32_0 : i32
    scf.if %2 {
      %c0_10 = arith.constant 0 : index
      %c0_11 = arith.constant 0 : index
      %13 = vector.load %arg4[%c0_10, %c0_11] : memref<1x128xf32, #tpu.memory_space<vmem>>, vector<1x128xf32>
      %14 = vector.shape_cast %13 : vector<1x128xf32> to vector<1x128xf32>
      %15 = vector.broadcast %14 : vector<1x128xf32> to vector<16x128xf32>
      %c0_12 = arith.constant 0 : index
      %c0_13 = arith.constant 0 : index
      %16 = vector.load %arg8[%c0_12, %c0_13] : memref<16x128xf32, #tpu.memory_space<vmem>>, vector<16x128xf32>
      tpu.vector_store %arg8[%c0_12, %c0_13], %15 {strides = array<i32>} : memref<16x128xf32, #tpu.memory_space<vmem>>, vector<16x128xf32>,
    } else {
    }
    %c0 = arith.constant 0 : index
    %c0_1 = arith.constant 0 : index
    %3 = vector.load %arg2[%c0, %c0_1] : memref<16x1024xf32, #tpu.memory_space<vmem>>, vector<16x1024xf32>
    %4 = arith.truncf %3 : vector<16x1024xf32> to vector<16x1024xbf16>
    %c0_2 = arith.constant 0 : index
    %c0_3 = arith.constant 0 : index
    %5 = vector.load %arg8[%c0_2, %c0_3] : memref<16x128xf32, #tpu.memory_space<vmem>>, vector<16x128xf32>
    %c0_4 = arith.constant 0 : index
    %c0_5 = arith.constant 0 : index
    %6 = vector.load %arg3[%c0_4, %c0_5] : memref<1024x128xbf16, #tpu.memory_space<vmem>>, vector<1024x128xbf16>
    %cst = arith.constant dense<0.000000e+00> : vector<16x128xf32>
    %7 = tpu.matmul %4, %6, %cst {dimension_numbers = #tpu.dot_dimension_numbers<[1], [0], [0], [1], [0, 0, 1, 1], [], []>} : vector<16x1024xbf16>, vector<1024x128xbf16>, vector<16x128xf32> -> vector<16x128xf32>
    %8 = arith.addf %5, %7 : vector<16x128xf32>
    %c0_6 = arith.constant 0 : index
    %c0_7 = arith.constant 0 : index
    %9 = vector.load %arg8[%c0_6, %c0_7] : memref<16x128xf32, #tpu.memory_space<vmem>>, vector<16x128xf32>
    tpu.vector_store %arg8[%c0_6, %c0_7], %8 {strides = array<i32>} : memref<16x128xf32, #tpu.memory_space<vmem>>, vector<16x128xf32>,
    %c0_i32_8 = arith.constant 0 : i32
    %10 = arith.cmpi eq, %arg1, %c0_i32_8 : i32
    %11 = arith.extui %10 : i1 to i32
    %c0_i32_9 = arith.constant 0 : i32
    %12 = arith.cmpi ne, %11, %c0_i32_9 : i32
    scf.if %12 {
      %c0_10 = arith.constant 0 : index
      %c0_11 = arith.constant 0 : index
      %13 = vector.load %arg8[%c0_10, %c0_11] : memref<16x128xf32, #tpu.memory_space<vmem>>, vector<16x128xf32>
      %cst_12 = arith.constant 0.000000e+00 : f32
      %14 = vector.broadcast %cst_12 : f32 to vector<16x128xf32>
      %15 = arith.maximumf %13, %14 : vector<16x128xf32>
      %16 = arith.truncf %15 : vector<16x128xf32> to vector<16x128xbf16>
      %c0_13 = arith.constant 0 : index
      %c0_14 = arith.constant 0 : index
      %17 = vector.load %arg5[%c0_13, %c0_14] : memref<128x128xbf16, #tpu.memory_space<vmem>>, vector<128x128xbf16>
      %cst_15 = arith.constant dense<0.000000e+00> : vector<16x128xf32>
      %18 = tpu.matmul %16, %17, %cst_15 {dimension_numbers = #tpu.dot_dimension_numbers<[1], [0], [0], [1], [0, 0, 1, 1], [], []>} : vector<16x128xbf16>, vector<128x128xbf16>, vector<16x128xf32> -> vector<16x128xf32>
      %c0_16 = arith.constant 0 : index
      %c0_17 = arith.constant 0 : index
      %19 = vector.load %arg6[%c0_16, %c0_17] : memref<1x128xf32, #tpu.memory_space<vmem>>, vector<1x128xf32>
      %20 = vector.broadcast %19 : vector<1x128xf32> to vector<16x128xf32>
      %21 = arith.addf %18, %20 : vector<16x128xf32>
      %c0_18 = arith.constant 0 : index
      %c0_19 = arith.constant 0 : index
      %22 = vector.load %arg7[%c0_18, %c0_19] : memref<16x128xf32, #tpu.memory_space<vmem>>, vector<16x128xf32>
      tpu.vector_store %arg7[%c0_18, %c0_19], %21 {strides = array<i32>} : memref<16x128xf32, #tpu.memory_space<vmem>>, vector<16x128xf32>,
    } else {
    }
    return
  }
  func.func @transform_0(%arg0: i32, %arg1: i32) -> (i32, i32) {
    %c0_i32 = arith.constant 0 : i32
    return %arg0, %arg1 : i32, i32
  }
  func.func @transform_1(%arg0: i32, %arg1: i32) -> (i32, i32) {
    %c0_i32 = arith.constant 0 : i32
    %c0_i32_0 = arith.constant 0 : i32
    return %arg1, %c0_i32 : i32, i32
  }
  func.func @transform_2(%arg0: i32, %arg1: i32) -> (i32, i32) {
    %c0_i32 = arith.constant 0 : i32
    %c0_i32_0 = arith.constant 0 : i32
    %c0_i32_1 = arith.constant 0 : i32
    return %c0_i32, %c0_i32_0 : i32, i32
  }
  func.func @transform_3(%arg0: i32, %arg1: i32) -> (i32, i32) {
    %c0_i32 = arith.constant 0 : i32
    %c0_i32_0 = arith.constant 0 : i32
    %c0_i32_1 = arith.constant 0 : i32
    return %c0_i32, %c0_i32_0 : i32, i32
  }
  func.func @transform_4(%arg0: i32, %arg1: i32) -> (i32, i32) {
    %c0_i32 = arith.constant 0 : i32
    %c0_i32_0 = arith.constant 0 : i32
    %c0_i32_1 = arith.constant 0 : i32
    return %c0_i32, %c0_i32_0 : i32, i32
  }
  func.func @transform_5(%arg0: i32, %arg1: i32) -> (i32, i32) {
    %c0_i32 = arith.constant 0 : i32
    %c0_i32_0 = arith.constant 0 : i32
    return %arg0, %c0_i32 : i32, i32
  }
}

</mosaic_0001>

<llo_original>
// kernel: tpu_custom_call.1
$region0: #{tpu_custom_call.1}
  #allocation0 [shape = 'u32[]', space=smem, size = 0x4, offset = 0x4, fixed_abs, tag = 'smem constant byte address 0x4 - core index']
  #allocation1 [shape = 'u32[144,128]{1,0:T(1,128)}', space=vmem, size = 0x12000, scoped, tag = 'internal scratch']
  #allocation2 [shape = 'f32[16,128]{1,0:T(8,128)}', space=vmem, size = 0x2000, scoped, tag = 'scratch operand']
  %s0 = inlined_call_operand.hbm [shape: f32[16,1024], index: 0, kind: input, shape index: {}]
  %s1 = inlined_call_operand.hbm [shape: bf16[1024,128], index: 1, kind: input, shape index: {}]
  %s2 = inlined_call_operand.vmem [shape: f32[1,128], index: 2, kind: input, shape index: {}]
  %s3 = inlined_call_operand.hbm [shape: bf16[128,128], index: 3, kind: input, shape index: {}]
  %s4 = inlined_call_operand.vmem [shape: f32[1,128], index: 4, kind: input, shape index: {}]
  %s5 = inlined_call_operand.hbm [shape: f32[16,128], index: 5, kind: output, shape index: {}]
  %s6 = sld [smem:[#allocation0]]
  $region50: #{tpu_custom_call.1} parent=0
    _
  %s8 = ssub.s32 1, %s6
  %s9 = scalar_select 0, %s8, %s6
  $region1: #{tpu_custom_call.1} parent=0
    #allocation3 [shape = 'u8[65536]{0}', space=vmem, size = 0x10000, scoped, tag = 'input window, operand 0, single buffered']
    #allocation4 [shape = 's32[1]{0}', space=sflag, size = 0x4, scoped, tag = 'scoped memory for tpu_custom_call.1']
    #allocation5 [shape = 's32[1]{0}', space=sflag, size = 0x4, scoped, tag = 'scoped memory for tpu_custom_call.1']
    #allocation6 [shape = 'u8[262144]{0}', space=vmem, size = 0x40000, scoped, tag = 'input window, operand 1, single buffered']
    #allocation7 [shape = 's32[1]{0}', space=sflag, size = 0x4, scoped, tag = 'scoped memory for tpu_custom_call.1']
    #allocation8 [shape = 'u8[32768]{0}', space=vmem, size = 0x8000, scoped, tag = 'input window, operand 3, single buffered']
    #allocation9 [shape = 'u8[8192]{0}', space=vmem, size = 0x2000, scoped, tag = 'output window, operand 0, single buffered']
    %10 = vsyncpa [#allocation4], 0
    %11 = vsyncpa [#allocation7], 0
    %12 = vsyncpa [#allocation5], 0
    // Predicated region
    $region2: #{tpu_custom_call.1} parent=1 // pred_check
      _
    $region3: #{tpu_custom_call.1} parent=1 // pred_check_branch
      %14 = sbr.rel (0) target = $region5
    $region4: #{tpu_custom_call.1} parent=1 // pred_region
      %s16 = ssub.s32 2048, 2048
      %17 = vsyncadd [#allocation4], %s16
      %s18 = sshll.u32 [#allocation3], 4
      %s19 = int_to_ptr.vmem [resolvable:$true] %s18
      %24 = dma.hbm_to_vmem [thread:$0]  %s0, 2048, %s19, [#allocation4], 1024, 1024, 64
    $region5: #{tpu_custom_call.1} parent=1 // pred_fallthru
      _
    // Predicated region
    $region6: #{tpu_custom_call.1} parent=1 // pred_check
      _
    $region7: #{tpu_custom_call.1} parent=1 // pred_check_branch
      %26 = sbr.rel (0) target = $region9
    $region8: #{tpu_custom_call.1} parent=1 // pred_region
      %s28 = ssub.s32 8192, 8192
      %29 = vsyncadd [#allocation7], %s28
      %s30 = sshll.u32 [#allocation6], 4
      %s31 = int_to_ptr.vmem [resolvable:$true] %s30
      %36 = dma.hbm_to_vmem [thread:$0]  %s1, 8192, %s31, [#allocation7], 64, 64, 4
    $region9: #{tpu_custom_call.1} parent=1 // pred_fallthru
      _
    // Predicated region
    $region10: #{tpu_custom_call.1} parent=1 // pred_check
      _
    $region11: #{tpu_custom_call.1} parent=1 // pred_check_branch
      %38 = sbr.rel (0) target = $region13
    $region12: #{tpu_custom_call.1} parent=1 // pred_region
      _
    $region13: #{tpu_custom_call.1} parent=1 // pred_fallthru
      _
    // Predicated region
    $region14: #{tpu_custom_call.1} parent=1 // pred_check
      _
    $region15: #{tpu_custom_call.1} parent=1 // pred_check_branch
      %40 = sbr.rel (0) target = $region17
    $region16: #{tpu_custom_call.1} parent=1 // pred_region
      %s42 = ssub.s32 1024, 1024
      %43 = vsyncadd [#allocation7], %s42
      %s44 = sshll.u32 [#allocation8], 4
      %s45 = int_to_ptr.vmem [resolvable:$true] %s44
      %50 = dma.hbm_to_vmem [thread:$0]  %s3, 1024, %s45, [#allocation7], 64, 64, 4
    $region17: #{tpu_custom_call.1} parent=1 // pred_fallthru
      _
    // Predicated region
    $region18: #{tpu_custom_call.1} parent=1 // pred_check
      _
    $region19: #{tpu_custom_call.1} parent=1 // pred_check_branch
      %52 = sbr.rel (0) target = $region21
    $region20: #{tpu_custom_call.1} parent=1 // pred_region
      _
    $region21: #{tpu_custom_call.1} parent=1 // pred_fallthru
      _
    // Predicated region
    $region22: #{tpu_custom_call.1} parent=1 // pred_check
      _
    $region23: #{tpu_custom_call.1} parent=1 // pred_check_branch
      %54 = sbr.rel (0) target = $region25
    $region24: #{tpu_custom_call.1} parent=1 // pred_region
      %55 = dma.done [#allocation4], 2048
    $region25: #{tpu_custom_call.1} parent=1 // pred_fallthru
      _
    // Predicated region
    $region26: #{tpu_custom_call.1} parent=1 // pred_check
      _
    $region27: #{tpu_custom_call.1} parent=1 // pred_check_branch
      %57 = sbr.rel (0) target = $region29
    $region28: #{tpu_custom_call.1} parent=1 // pred_region
      %58 = dma.done [#allocation7], 8192
    $region29: #{tpu_custom_call.1} parent=1 // pred_fallthru
      _
    // Predicated region
    $region30: #{tpu_custom_call.1} parent=1 // pred_check
      _
    $region31: #{tpu_custom_call.1} parent=1 // pred_check_branch
      %60 = sbr.rel (0) target = $region33
    $region32: #{tpu_custom_call.1} parent=1 // pred_region
      %61 = dma.done [#allocation7], 1024
    $region33: #{tpu_custom_call.1} parent=1 // pred_fallthru
      _
    %p63 = scmp.eq.s32.totalorder 0, 0
    // Predicated region
    $region34: #{tpu_custom_call.1} parent=1 // pred_check
      %p64 = pneg %p63
    $region35: #{tpu_custom_call.1} parent=1 // pred_check_branch
      %66 = sbr.rel (%p64) target = $region37
    $region36: #{tpu_custom_call.1} parent=1 // pred_region
      %v67 = vld [vmem:[%s2] sm:$0x1]
      %v69 = vlaneseq
      %v70 = vshrl.u32 %v69, 7
      %v71 = vsub.s32 0, %v70
      %v72 = vrot.slane %v67, %v71
      %74 = vst [vmem:[#allocation2] sm:$0xff] %v72
      %75 = vst [vmem:[#allocation2 + $0x8] sm:$0xff] %v72
    $region37: #{tpu_custom_call.1} parent=1 // pred_fallthru
      _
    %v76 = vld [vmem:[#allocation3] sm:$0xff]
    %v77 = vld [vmem:[#allocation3 + $0x8] sm:$0xff]
    %v78 = vld [vmem:[#allocation3 + $0x10] sm:$0xff]
    %v79 = vld [vmem:[#allocation3 + $0x18] sm:$0xff]
    %v80 = vld [vmem:[#allocation3 + $0x20] sm:$0xff]
    %v81 = vld [vmem:[#allocation3 + $0x28] sm:$0xff]
    %v82 = vld [vmem:[#allocation3 + $0x30] sm:$0xff]
    %v83 = vld [vmem:[#allocation3 + $0x38] sm:$0xff]
    %v84 = vld [vmem:[#allocation3 + $0x40] sm:$0xff]
    %v85 = vld [vmem:[#allocation3 + $0x48] sm:$0xff]
    %v86 = vld [vmem:[#allocation3 + $0x50] sm:$0xff]
    %v87 = vld [vmem:[#allocation3 + $0x58] sm:$0xff]
    %v88 = vld [vmem:[#allocation3 + $0x60] sm:$0xff]
    %v89 = vld [vmem:[#allocation3 + $0x68] sm:$0xff]
    %v90 = vld [vmem:[#allocation3 + $0x70] sm:$0xff]
    %v91 = vld [vmem:[#allocation3 + $0x78] sm:$0xff]
    %v92 = vpack.c.bf16 %v84, %v76
    %v93 = vpack.c.bf16 %v85, %v77
    %v94 = vpack.c.bf16 %v86, %v78
    %v95 = vpack.c.bf16 %v87, %v79
    %v96 = vpack.c.bf16 %v88, %v80
    %v97 = vpack.c.bf16 %v89, %v81
    %v98 = vpack.c.bf16 %v90, %v82
    %v99 = vpack.c.bf16 %v91, %v83
    %v100 = vld [vmem:[#allocation2] sm:$0xff]
    %v101 = vld [vmem:[#allocation2 + $0x8] sm:$0xff]
    %v102 = vld [vmem:[#allocation6] sm:$0xf]
    %v103 = vld [vmem:[#allocation6 + $0x4] sm:$0xf]
    %v104 = vld [vmem:[#allocation6 + $0x8] sm:$0xf]
    %v105 = vld [vmem:[#allocation6 + $0xc] sm:$0xf]
    %v106 = vld [vmem:[#allocation6 + $0x10] sm:$0xf]
    %v107 = vld [vmem:[#allocation6 + $0x14] sm:$0xf]
    %v108 = vld [vmem:[#allocation6 + $0x18] sm:$0xf]
    %v109 = vld [vmem:[#allocation6 + $0x1c] sm:$0xf]
    %v110 = vld [vmem:[#allocation6 + $0x20] sm:$0xf]
    %v111 = vld [vmem:[#allocation6 + $0x24] sm:$0xf]
    %v112 = vld [vmem:[#allocation6 + $0x28] sm:$0xf]
    %v113 = vld [vmem:[#allocation6 + $0x2c] sm:$0xf]
    %v114 = vld [vmem:[#allocation6 + $0x30] sm:$0xf]
    %v115 = vld [vmem:[#allocation6 + $0x34] sm:$0xf]
    %v116 = vld [vmem:[#allocation6 + $0x38] sm:$0xf]
    %v117 = vld [vmem:[#allocation6 + $0x3c] sm:$0xf]
    %v118 = vld [vmem:[#allocation6 + $0x40] sm:$0xf]
    %v119 = vld [vmem:[#allocation6 + $0x44] sm:$0xf]
    %v120 = vld [vmem:[#allocation6 + $0x48] sm:$0xf]
    %v121 = vld [vmem:[#allocation6 + $0x4c] sm:$0xf]
    %v122 = vld [vmem:[#allocation6 + $0x50] sm:$0xf]
    %v123 = vld [vmem:[#allocation6 + $0x54] sm:$0xf]
    %v124 = vld [vmem:[#allocation6 + $0x58] sm:$0xf]
    %v125 = vld [vmem:[#allocation6 + $0x5c] sm:$0xf]
    %v126 = vld [vmem:[#allocation6 + $0x60] sm:$0xf]
    %v127 = vld [vmem:[#allocation6 + $0x64] sm:$0xf]
    %v128 = vld [vmem:[#allocation6 + $0x68] sm:$0xf]
    %v129 = vld [vmem:[#allocation6 + $0x6c] sm:$0xf]
    %v130 = vld [vmem:[#allocation6 + $0x70] sm:$0xf]
    %v131 = vld [vmem:[#allocation6 + $0x74] sm:$0xf]
    %v132 = vld [vmem:[#allocation6 + $0x78] sm:$0xf]
    %v133 = vld [vmem:[#allocation6 + $0x7c] sm:$0xf]
    %v134 = vld [vmem:[#allocation6 + $0x80] sm:$0xf]
    %v135 = vld [vmem:[#allocation6 + $0x84] sm:$0xf]
    %v136 = vld [vmem:[#allocation6 + $0x88] sm:$0xf]
    %v137 = vld [vmem:[#allocation6 + $0x8c] sm:$0xf]
    %v138 = vld [vmem:[#allocation6 + $0x90] sm:$0xf]
    %v139 = vld [vmem:[#allocation6 + $0x94] sm:$0xf]
    %v140 = vld [vmem:[#allocation6 + $0x98] sm:$0xf]
    %v141 = vld [vmem:[#allocation6 + $0x9c] sm:$0xf]
    %v142 = vld [vmem:[#allocation6 + $0xa0] sm:$0xf]
    %v143 = vld [vmem:[#allocation6 + $0xa4] sm:$0xf]
    %v144 = vld [vmem:[#allocation6 + $0xa8] sm:$0xf]
    %v145 = vld [vmem:[#allocation6 + $0xac] sm:$0xf]
    %v146 = vld [vmem:[#allocation6 + $0xb0] sm:$0xf]
    %v147 = vld [vmem:[#allocation6 + $0xb4] sm:$0xf]
    %v148 = vld [vmem:[#allocation6 + $0xb8] sm:$0xf]
    %v149 = vld [vmem:[#allocation6 + $0xbc] sm:$0xf]
    %v150 = vld [vmem:[#allocation6 + $0xc0] sm:$0xf]
    %v151 = vld [vmem:[#allocation6 + $0xc4] sm:$0xf]
    %v152 = vld [vmem:[#allocation6 + $0xc8] sm:$0xf]
    %v153 = vld [vmem:[#allocation6 + $0xcc] sm:$0xf]
    %v154 = vld [vmem:[#allocation6 + $0xd0] sm:$0xf]
    %v155 = vld [vmem:[#allocation6 + $0xd4] sm:$0xf]
    %v156 = vld [vmem:[#allocation6 + $0xd8] sm:$0xf]
    %v157 = vld [vmem:[#allocation6 + $0xdc] sm:$0xf]
    %v158 = vld [vmem:[#allocation6 + $0xe0] sm:$0xf]
    %v159 = vld [vmem:[#allocation6 + $0xe4] sm:$0xf]
    %v160 = vld [vmem:[#allocation6 + $0xe8] sm:$0xf]
    %v161 = vld [vmem:[#allocation6 + $0xec] sm:$0xf]
    %v162 = vld [vmem:[#allocation6 + $0xf0] sm:$0xf]
    %v163 = vld [vmem:[#allocation6 + $0xf4] sm:$0xf]
    %v164 = vld [vmem:[#allocation6 + $0xf8] sm:$0xf]
    %v165 = vld [vmem:[#allocation6 + $0xfc] sm:$0xf]
    %v166 = vld [vmem:[#allocation6 + $0x100] sm:$0xf]
    %v167 = vld [vmem:[#allocation6 + $0x104] sm:$0xf]
    %v168 = vld [vmem:[#allocation6 + $0x108] sm:$0xf]
    %v169 = vld [vmem:[#allocation6 + $0x10c] sm:$0xf]
    %v170 = vld [vmem:[#allocation6 + $0x110] sm:$0xf]
    %v171 = vld [vmem:[#allocation6 + $0x114] sm:$0xf]
    %v172 = vld [vmem:[#allocation6 + $0x118] sm:$0xf]
    %v173 = vld [vmem:[#allocation6 + $0x11c] sm:$0xf]
    %v174 = vld [vmem:[#allocation6 + $0x120] sm:$0xf]
    %v175 = vld [vmem:[#allocation6 + $0x124] sm:$0xf]
    %v176 = vld [vmem:[#allocation6 + $0x128] sm:$0xf]
    %v177 = vld [vmem:[#allocation6 + $0x12c] sm:$0xf]
    %v178 = vld [vmem:[#allocation6 + $0x130] sm:$0xf]
    %v179 = vld [vmem:[#allocation6 + $0x134] sm:$0xf]
    %v180 = vld [vmem:[#allocation6 + $0x138] sm:$0xf]
    %v181 = vld [vmem:[#allocation6 + $0x13c] sm:$0xf]
    %v182 = vld [vmem:[#allocation6 + $0x140] sm:$0xf]
    %v183 = vld [vmem:[#allocation6 + $0x144] sm:$0xf]
    %v184 = vld [vmem:[#allocation6 + $0x148] sm:$0xf]
    %v185 = vld [vmem:[#allocation6 + $0x14c] sm:$0xf]
    %v186 = vld [vmem:[#allocation6 + $0x150] sm:$0xf]
    %v187 = vld [vmem:[#allocation6 + $0x154] sm:$0xf]
    %v188 = vld [vmem:[#allocation6 + $0x158] sm:$0xf]
    %v189 = vld [vmem:[#allocation6 + $0x15c] sm:$0xf]
    %v190 = vld [vmem:[#allocation6 + $0x160] sm:$0xf]
    %v191 = vld [vmem:[#allocation6 + $0x164] sm:$0xf]
    %v192 = vld [vmem:[#allocation6 + $0x168] sm:$0xf]
    %v193 = vld [vmem:[#allocation6 + $0x16c] sm:$0xf]
    %v194 = vld [vmem:[#allocation6 + $0x170] sm:$0xf]
    %v195 = vld [vmem:[#allocation6 + $0x174] sm:$0xf]
    %v196 = vld [vmem:[#allocation6 + $0x178] sm:$0xf]
    %v197 = vld [vmem:[#allocation6 + $0x17c] sm:$0xf]
    %v198 = vld [vmem:[#allocation6 + $0x180] sm:$0xf]
    %v199 = vld [vmem:[#allocation6 + $0x184] sm:$0xf]
    %v200 = vld [vmem:[#allocation6 + $0x188] sm:$0xf]
    %v201 = vld [vmem:[#allocation6 + $0x18c] sm:$0xf]
    %v202 = vld [vmem:[#allocation6 + $0x190] sm:$0xf]
    %v203 = vld [vmem:[#allocation6 + $0x194] sm:$0xf]
    %v204 = vld [vmem:[#allocation6 + $0x198] sm:$0xf]
    %v205 = vld [vmem:[#allocation6 + $0x19c] sm:$0xf]
    %v206 = vld [vmem:[#allocation6 + $0x1a0] sm:$0xf]
    %v207 = vld [vmem:[#allocation6 + $0x1a4] sm:$0xf]
    %v208 = vld [vmem:[#allocation6 + $0x1a8] sm:$0xf]
    %v209 = vld [vmem:[#allocation6 + $0x1ac] sm:$0xf]
    %v210 = vld [vmem:[#allocation6 + $0x1b0] sm:$0xf]
    %v211 = vld [vmem:[#allocation6 + $0x1b4] sm:$0xf]
    %v212 = vld [vmem:[#allocation6 + $0x1b8] sm:$0xf]
    %v213 = vld [vmem:[#allocation6 + $0x1bc] sm:$0xf]
    %v214 = vld [vmem:[#allocation6 + $0x1c0] sm:$0xf]
    %v215 = vld [vmem:[#allocation6 + $0x1c4] sm:$0xf]
    %v216 = vld [vmem:[#allocation6 + $0x1c8] sm:$0xf]
    %v217 = vld [vmem:[#allocation6 + $0x1cc] sm:$0xf]
    %v218 = vld [vmem:[#allocation6 + $0x1d0] sm:$0xf]
    %v219 = vld [vmem:[#allocation6 + $0x1d4] sm:$0xf]
    %v220 = vld [vmem:[#allocation6 + $0x1d8] sm:$0xf]
    %v221 = vld [vmem:[#allocation6 + $0x1dc] sm:$0xf]
    %v222 = vld [vmem:[#allocation6 + $0x1e0] sm:$0xf]
    %v223 = vld [vmem:[#allocation6 + $0x1e4] sm:$0xf]
    %v224 = vld [vmem:[#allocation6 + $0x1e8] sm:$0xf]
    %v225 = vld [vmem:[#allocation6 + $0x1ec] sm:$0xf]
    %v226 = vld [vmem:[#allocation6 + $0x1f0] sm:$0xf]
    %v227 = vld [vmem:[#allocation6 + $0x1f4] sm:$0xf]
    %v228 = vld [vmem:[#allocation6 + $0x1f8] sm:$0xf]
    %v229 = vld [vmem:[#allocation6 + $0x1fc] sm:$0xf]
    %v358 = vunpack.c.l.b16 %v102
    %v359 = vunpack.c.l.b16 %v103
    %v360 = vunpack.c.l.b16 %v104
    %v361 = vunpack.c.l.b16 %v105
    %v362 = vunpack.c.l.b16 %v106
    %v363 = vunpack.c.l.b16 %v107
    %v364 = vunpack.c.l.b16 %v108
    %v365 = vunpack.c.l.b16 %v109
    %v366 = vunpack.c.l.b16 %v110
    %v367 = vunpack.c.l.b16 %v111
    %v368 = vunpack.c.l.b16 %v112
    %v369 = vunpack.c.l.b16 %v113
    %v370 = vunpack.c.l.b16 %v114
    %v371 = vunpack.c.l.b16 %v115
    %v372 = vunpack.c.l.b16 %v116
    %v373 = vunpack.c.l.b16 %v117
    %v374 = vunpack.c.l.b16 %v118
    %v375 = vunpack.c.l.b16 %v119
    %v376 = vunpack.c.l.b16 %v120
    %v377 = vunpack.c.l.b16 %v121
    %v378 = vunpack.c.l.b16 %v122
    %v379 = vunpack.c.l.b16 %v123
    %v380 = vunpack.c.l.b16 %v124
    %v381 = vunpack.c.l.b16 %v125
    %v382 = vunpack.c.l.b16 %v126
    %v383 = vunpack.c.l.b16 %v127
    %v384 = vunpack.c.l.b16 %v128
    %v385 = vunpack.c.l.b16 %v129
    %v386 = vunpack.c.l.b16 %v130
    %v387 = vunpack.c.l.b16 %v131
    %v388 = vunpack.c.l.b16 %v132
    %v389 = vunpack.c.l.b16 %v133
    %v390 = vunpack.c.l.b16 %v134
    %v391 = vunpack.c.l.b16 %v135
    %v392 = vunpack.c.l.b16 %v136
    %v393 = vunpack.c.l.b16 %v137
    %v394 = vunpack.c.l.b16 %v138
    %v395 = vunpack.c.l.b16 %v139
    %v396 = vunpack.c.l.b16 %v140
    %v397 = vunpack.c.l.b16 %v141
    %v398 = vunpack.c.l.b16 %v142
    %v399 = vunpack.c.l.b16 %v143
    %v400 = vunpack.c.l.b16 %v144
    %v401 = vunpack.c.l.b16 %v145
    %v402 = vunpack.c.l.b16 %v146
    %v403 = vunpack.c.l.b16 %v147
    %v404 = vunpack.c.l.b16 %v148
    %v405 = vunpack.c.l.b16 %v149
    %v406 = vunpack.c.l.b16 %v150
    %v407 = vunpack.c.l.b16 %v151
    %v408 = vunpack.c.l.b16 %v152
    %v409 = vunpack.c.l.b16 %v153
    %v410 = vunpack.c.l.b16 %v154
    %v411 = vunpack.c.l.b16 %v155
    %v412 = vunpack.c.l.b16 %v156
    %v413 = vunpack.c.l.b16 %v157
    %v414 = vunpack.c.l.b16 %v158
    %v415 = vunpack.c.l.b16 %v159
    %v416 = vunpack.c.l.b16 %v160
    %v417 = vunpack.c.l.b16 %v161
    %v418 = vunpack.c.l.b16 %v162
    %v419 = vunpack.c.l.b16 %v163
    %v420 = vunpack.c.l.b16 %v164
    %v421 = vunpack.c.l.b16 %v165
    %v422 = vunpack.c.l.b16 %v166
    %v423 = vunpack.c.l.b16 %v167
    %v424 = vunpack.c.l.b16 %v168
    %v425 = vunpack.c.l.b16 %v169
    %v426 = vunpack.c.l.b16 %v170
    %v427 = vunpack.c.l.b16 %v171
    %v428 = vunpack.c.l.b16 %v172
    %v429 = vunpack.c.l.b16 %v173
    %v430 = vunpack.c.l.b16 %v174
    %v431 = vunpack.c.l.b16 %v175
    %v432 = vunpack.c.l.b16 %v176
    %v433 = vunpack.c.l.b16 %v177
    %v434 = vunpack.c.l.b16 %v178
    %v435 = vunpack.c.l.b16 %v179
    %v436 = vunpack.c.l.b16 %v180
    %v437 = vunpack.c.l.b16 %v181
    %v438 = vunpack.c.l.b16 %v182
    %v439 = vunpack.c.l.b16 %v183
    %v440 = vunpack.c.l.b16 %v184
    %v441 = vunpack.c.l.b16 %v185
    %v442 = vunpack.c.l.b16 %v186
    %v443 = vunpack.c.l.b16 %v187
    %v444 = vunpack.c.l.b16 %v188
    %v445 = vunpack.c.l.b16 %v189
    %v446 = vunpack.c.l.b16 %v190
    %v447 = vunpack.c.l.b16 %v191
    %v448 = vunpack.c.l.b16 %v192
    %v449 = vunpack.c.l.b16 %v193
    %v450 = vunpack.c.l.b16 %v194
    %v451 = vunpack.c.l.b16 %v195
    %v452 = vunpack.c.l.b16 %v196
    %v453 = vunpack.c.l.b16 %v197
    %v454 = vunpack.c.l.b16 %v198
    %v455 = vunpack.c.l.b16 %v199
    %v456 = vunpack.c.l.b16 %v200
    %v457 = vunpack.c.l.b16 %v201
    %v458 = vunpack.c.l.b16 %v202
    %v459 = vunpack.c.l.b16 %v203
    %v460 = vunpack.c.l.b16 %v204
    %v461 = vunpack.c.l.b16 %v205
    %v462 = vunpack.c.l.b16 %v206
    %v463 = vunpack.c.l.b16 %v207
    %v464 = vunpack.c.l.b16 %v208
    %v465 = vunpack.c.l.b16 %v209
    %v466 = vunpack.c.l.b16 %v210
    %v467 = vunpack.c.l.b16 %v211
    %v468 = vunpack.c.l.b16 %v212
    %v469 = vunpack.c.l.b16 %v213
    %v470 = vunpack.c.l.b16 %v214
    %v471 = vunpack.c.l.b16 %v215
    %v472 = vunpack.c.l.b16 %v216
    %v473 = vunpack.c.l.b16 %v217
    %v474 = vunpack.c.l.b16 %v218
    %v475 = vunpack.c.l.b16 %v219
    %v476 = vunpack.c.l.b16 %v220
    %v477 = vunpack.c.l.b16 %v221
    %v478 = vunpack.c.l.b16 %v222
    %v479 = vunpack.c.l.b16 %v223
    %v480 = vunpack.c.l.b16 %v224
    %v481 = vunpack.c.l.b16 %v225
    %v482 = vunpack.c.l.b16 %v226
    %v483 = vunpack.c.l.b16 %v227
    %v484 = vunpack.c.l.b16 %v228
    %v485 = vunpack.c.l.b16 %v229
    %v486 = vpack.c.b16 %v359, %v358
    %v487 = vpack.c.b16 %v361, %v360
    %v488 = vpack.c.b16 %v363, %v362
    %v489 = vpack.c.b16 %v365, %v364
    %v490 = vpack.c.b16 %v367, %v366
    %v491 = vpack.c.b16 %v369, %v368
    %v492 = vpack.c.b16 %v371, %v370
    %v493 = vpack.c.b16 %v373, %v372
    %v494 = vpack.c.b16 %v375, %v374
    %v495 = vpack.c.b16 %v377, %v376
    %v496 = vpack.c.b16 %v379, %v378
    %v497 = vpack.c.b16 %v381, %v380
    %v498 = vpack.c.b16 %v383, %v382
    %v499 = vpack.c.b16 %v385, %v384
    %v500 = vpack.c.b16 %v387, %v386
    %v501 = vpack.c.b16 %v389, %v388
    %v502 = vpack.c.b16 %v391, %v390
    %v503 = vpack.c.b16 %v393, %v392
    %v504 = vpack.c.b16 %v395, %v394
    %v505 = vpack.c.b16 %v397, %v396
    %v506 = vpack.c.b16 %v399, %v398
    %v507 = vpack.c.b16 %v401, %v400
    %v508 = vpack.c.b16 %v403, %v402
    %v509 = vpack.c.b16 %v405, %v404
    %v510 = vpack.c.b16 %v407, %v406
    %v511 = vpack.c.b16 %v409, %v408
    %v512 = vpack.c.b16 %v411, %v410
    %v513 = vpack.c.b16 %v413, %v412
    %v514 = vpack.c.b16 %v415, %v414
    %v515 = vpack.c.b16 %v417, %v416
    %v516 = vpack.c.b16 %v419, %v418
    %v517 = vpack.c.b16 %v421, %v420
    %v518 = vpack.c.b16 %v423, %v422
    %v519 = vpack.c.b16 %v425, %v424
    %v520 = vpack.c.b16 %v427, %v426
    %v521 = vpack.c.b16 %v429, %v428
    %v522 = vpack.c.b16 %v431, %v430
    %v523 = vpack.c.b16 %v433, %v432
    %v524 = vpack.c.b16 %v435, %v434
    %v525 = vpack.c.b16 %v437, %v436
    %v526 = vpack.c.b16 %v439, %v438
    %v527 = vpack.c.b16 %v441, %v440
    %v528 = vpack.c.b16 %v443, %v442
    %v529 = vpack.c.b16 %v445, %v444
    %v530 = vpack.c.b16 %v447, %v446
    %v531 = vpack.c.b16 %v449, %v448
    %v532 = vpack.c.b16 %v451, %v450
    %v533 = vpack.c.b16 %v453, %v452
    %v534 = vpack.c.b16 %v455, %v454
    %v535 = vpack.c.b16 %v457, %v456
    %v536 = vpack.c.b16 %v459, %v458
    %v537 = vpack.c.b16 %v461, %v460
    %v538 = vpack.c.b16 %v463, %v462
    %v539 = vpack.c.b16 %v465, %v464
    %v540 = vpack.c.b16 %v467, %v466
    %v541 = vpack.c.b16 %v469, %v468
    %v542 = vpack.c.b16 %v471, %v470
    %v543 = vpack.c.b16 %v473, %v472
    %v544 = vpack.c.b16 %v475, %v474
    %v545 = vpack.c.b16 %v477, %v476
    %v546 = vpack.c.b16 %v479, %v478
    %v547 = vpack.c.b16 %v481, %v480
    %v548 = vpack.c.b16 %v483, %v482
    %v549 = vpack.c.b16 %v485, %v484
    %614 = vmatprep.subr.bf16.mxu0 0
    %615 = vmatpush1.bf16.msra.mxu0 %v486
    %616 = vmatprep.subr.bf16.mxu0 0
    %617 = vmatpush1.bf16.msra.mxu0 %v487
    %618 = vmatprep.subr.bf16.mxu0 0
    %619 = vmatpush1.bf16.msra.mxu0 %v488
    %620 = vmatprep.subr.bf16.mxu0 0
    %621 = vmatpush1.bf16.msra.mxu0 %v489
    %622 = vmatprep.subr.bf16.mxu0 0
    %623 = vmatpush1.bf16.msra.mxu0 %v490
    %624 = vmatprep.subr.bf16.mxu0 0
    %625 = vmatpush1.bf16.msra.mxu0 %v491
    %626 = vmatprep.subr.bf16.mxu0 0
    %627 = vmatpush1.bf16.msra.mxu0 %v492
    %628 = vmatprep.subr.bf16.mxu0 0
    %629 = vmatpush1.bf16.msra.mxu0 %v493
    %630 = vmatprep.subr.bf16.mxu0 0
    %631 = vmatpush1.bf16.msra.mxu0 %v494
    %632 = vmatprep.subr.bf16.mxu0 0
    %633 = vmatpush1.bf16.msra.mxu0 %v495
    %634 = vmatprep.subr.bf16.mxu0 0
    %635 = vmatpush1.bf16.msra.mxu0 %v496
    %636 = vmatprep.subr.bf16.mxu0 0
    %637 = vmatpush1.bf16.msra.mxu0 %v497
    %638 = vmatprep.subr.bf16.mxu0 0
    %639 = vmatpush1.bf16.msra.mxu0 %v498
    %640 = vmatprep.subr.bf16.mxu0 0
    %641 = vmatpush1.bf16.msra.mxu0 %v499
    %642 = vmatprep.subr.bf16.mxu0 0
    %643 = vmatpush1.bf16.msra.mxu0 %v500
    %644 = vmatprep.subr.bf16.mxu0 0
    %645 = vmatpush1.bf16.msra.mxu0 %v501
    %646 = vmatprep.mubr.bf16.mxu0 %v93
    %647 = vmatmul.mubr.bf16.gmra.mrb[0].mxu0 %v92
    %v648 = vpop.f32.mrb[0].mxu0
    %v649 = vadd.f32 0.0, %v648
    %v650 = vpop.f32.mrb[0].mxu0
    %v651 = vpop.f32.mrb[0].mxu0
    %v652 = vadd.f32 0.0, %v651
    %v653 = vpop.f32.mrb[0].mxu0
    %654 = vdwg.mxu0
    %655 = vmatprep.subr.bf16.mxu0 0
    %656 = vmatpush1.bf16.msra.mxu0 %v502
    %657 = vmatprep.subr.bf16.mxu0 0
    %658 = vmatpush1.bf16.msra.mxu0 %v503
    %659 = vmatprep.subr.bf16.mxu0 0
    %660 = vmatpush1.bf16.msra.mxu0 %v504
    %661 = vmatprep.subr.bf16.mxu0 0
    %662 = vmatpush1.bf16.msra.mxu0 %v505
    %663 = vmatprep.subr.bf16.mxu0 0
    %664 = vmatpush1.bf16.msra.mxu0 %v506
    %665 = vmatprep.subr.bf16.mxu0 0
    %666 = vmatpush1.bf16.msra.mxu0 %v507
    %667 = vmatprep.subr.bf16.mxu0 0
    %668 = vmatpush1.bf16.msra.mxu0 %v508
    %669 = vmatprep.subr.bf16.mxu0 0
    %670 = vmatpush1.bf16.msra.mxu0 %v509
    %671 = vmatprep.subr.bf16.mxu0 0
    %672 = vmatpush1.bf16.msra.mxu0 %v510
    %673 = vmatprep.subr.bf16.mxu0 0
    %674 = vmatpush1.bf16.msra.mxu0 %v511
    %675 = vmatprep.subr.bf16.mxu0 0
    %676 = vmatpush1.bf16.msra.mxu0 %v512
    %677 = vmatprep.subr.bf16.mxu0 0
    %678 = vmatpush1.bf16.msra.mxu0 %v513
    %679 = vmatprep.subr.bf16.mxu0 0
    %680 = vmatpush1.bf16.msra.mxu0 %v514
    %681 = vmatprep.subr.bf16.mxu0 0
    %682 = vmatpush1.bf16.msra.mxu0 %v515
    %683 = vmatprep.subr.bf16.mxu0 0
    %684 = vmatpush1.bf16.msra.mxu0 %v516
    %685 = vmatprep.subr.bf16.mxu0 0
    %686 = vmatpush1.bf16.msra.mxu0 %v517
    %687 = vmatprep.mubr.bf16.mxu0 %v95
    %688 = vmatmul.mubr.bf16.gmra.mrb[0].mxu0 %v94
    %v689 = vpop.f32.mrb[0].mxu0
    %v690 = vadd.f32 %v649, %v689
    %v691 = vpop.f32.mrb[0].mxu0
    %v692 = vpop.f32.mrb[0].mxu0
    %v693 = vadd.f32 %v652, %v692
    %v694 = vpop.f32.mrb[0].mxu0
    %695 = vdwg.mxu0
    %696 = vmatprep.subr.bf16.mxu0 0
    %697 = vmatpush1.bf16.msra.mxu0 %v518
    %698 = vmatprep.subr.bf16.mxu0 0
    %699 = vmatpush1.bf16.msra.mxu0 %v519
    %700 = vmatprep.subr.bf16.mxu0 0
    %701 = vmatpush1.bf16.msra.mxu0 %v520
    %702 = vmatprep.subr.bf16.mxu0 0
    %703 = vmatpush1.bf16.msra.mxu0 %v521
    %704 = vmatprep.subr.bf16.mxu0 0
    %705 = vmatpush1.bf16.msra.mxu0 %v522
    %706 = vmatprep.subr.bf16.mxu0 0
    %707 = vmatpush1.bf16.msra.mxu0 %v523
    %708 = vmatprep.subr.bf16.mxu0 0
    %709 = vmatpush1.bf16.msra.mxu0 %v524
    %710 = vmatprep.subr.bf16.mxu0 0
    %711 = vmatpush1.bf16.msra.mxu0 %v525
    %712 = vmatprep.subr.bf16.mxu0 0
    %713 = vmatpush1.bf16.msra.mxu0 %v526
    %714 = vmatprep.subr.bf16.mxu0 0
    %715 = vmatpush1.bf16.msra.mxu0 %v527
    %716 = vmatprep.subr.bf16.mxu0 0
    %717 = vmatpush1.bf16.msra.mxu0 %v528
    %718 = vmatprep.subr.bf16.mxu0 0
    %719 = vmatpush1.bf16.msra.mxu0 %v529
    %720 = vmatprep.subr.bf16.mxu0 0
    %721 = vmatpush1.bf16.msra.mxu0 %v530
    %722 = vmatprep.subr.bf16.mxu0 0
    %723 = vmatpush1.bf16.msra.mxu0 %v531
    %724 = vmatprep.subr.bf16.mxu0 0
    %725 = vmatpush1.bf16.msra.mxu0 %v532
    %726 = vmatprep.subr.bf16.mxu0 0
    %727 = vmatpush1.bf16.msra.mxu0 %v533
    %728 = vmatprep.mubr.bf16.mxu0 %v97
    %729 = vmatmul.mubr.bf16.gmra.mrb[0].mxu0 %v96
    %v730 = vpop.f32.mrb[0].mxu0
    %v731 = vadd.f32 %v690, %v730
    %v732 = vpop.f32.mrb[0].mxu0
    %v733 = vpop.f32.mrb[0].mxu0
    %v734 = vadd.f32 %v693, %v733
    %v735 = vpop.f32.mrb[0].mxu0
    %736 = vdwg.mxu0
    %737 = vmatprep.subr.bf16.mxu0 0
    %738 = vmatpush1.bf16.msra.mxu0 %v534
    %739 = vmatprep.subr.bf16.mxu0 0
    %740 = vmatpush1.bf16.msra.mxu0 %v535
    %741 = vmatprep.subr.bf16.mxu0 0
    %742 = vmatpush1.bf16.msra.mxu0 %v536
    %743 = vmatprep.subr.bf16.mxu0 0
    %744 = vmatpush1.bf16.msra.mxu0 %v537
    %745 = vmatprep.subr.bf16.mxu0 0
    %746 = vmatpush1.bf16.msra.mxu0 %v538
    %747 = vmatprep.subr.bf16.mxu0 0
    %748 = vmatpush1.bf16.msra.mxu0 %v539
    %749 = vmatprep.subr.bf16.mxu0 0
    %750 = vmatpush1.bf16.msra.mxu0 %v540
    %751 = vmatprep.subr.bf16.mxu0 0
    %752 = vmatpush1.bf16.msra.mxu0 %v541
    %753 = vmatprep.subr.bf16.mxu0 0
    %754 = vmatpush1.bf16.msra.mxu0 %v542
    %755 = vmatprep.subr.bf16.mxu0 0
    %756 = vmatpush1.bf16.msra.mxu0 %v543
    %757 = vmatprep.subr.bf16.mxu0 0
    %758 = vmatpush1.bf16.msra.mxu0 %v544
    %759 = vmatprep.subr.bf16.mxu0 0
    %760 = vmatpush1.bf16.msra.mxu0 %v545
    %761 = vmatprep.subr.bf16.mxu0 0
    %762 = vmatpush1.bf16.msra.mxu0 %v546
    %763 = vmatprep.subr.bf16.mxu0 0
    %764 = vmatpush1.bf16.msra.mxu0 %v547
    %765 = vmatprep.subr.bf16.mxu0 0
    %766 = vmatpush1.bf16.msra.mxu0 %v548
    %767 = vmatprep.subr.bf16.mxu0 0
    %768 = vmatpush1.bf16.msra.mxu0 %v549
    %769 = vmatprep.mubr.bf16.mxu0 %v99
    %770 = vmatmul.mubr.bf16.gmra.mrb[0].mxu0 %v98
    %v771 = vpop.f32.mrb[0].mxu0
    %v772 = vadd.f32 %v731, %v771
    %v773 = vpop.f32.mrb[0].mxu0
    %v774 = vpop.f32.mrb[0].mxu0
    %v775 = vadd.f32 %v734, %v774
    %v776 = vpop.f32.mrb[0].mxu0
    %777 = vdwg.mxu0
    %v778 = vadd.f32 %v100, %v772
    %v779 = vadd.f32 %v101, %v775
    %780 = vst [vmem:[#allocation2] sm:$0xff] %v778
    %781 = vst [vmem:[#allocation2 + $0x8] sm:$0xff] %v779
    // Predicated region
    $region38: #{tpu_custom_call.1} parent=1 // pred_check
      %p782 = pneg %p63
    $region39: #{tpu_custom_call.1} parent=1 // pred_check_branch
      %784 = sbr.rel (%p782) target = $region41
    $region40: #{tpu_custom_call.1} parent=1 // pred_region
      %v785 = vld [vmem:[#allocation2] sm:$0xff]
      %v786 = vld [vmem:[#allocation2 + $0x8] sm:$0xff]
      %v787 = vmax.f32 %v785, 0.0
      %v788 = vmax.f32 %v786, 0.0
      %v789 = vpack.c.bf16 %v788, %v787
      %v790 = vld [vmem:[#allocation8] sm:$0xf]
      %v791 = vld [vmem:[#allocation8 + $0x4] sm:$0xf]
      %v792 = vld [vmem:[#allocation8 + $0x8] sm:$0xf]
      %v793 = vld [vmem:[#allocation8 + $0xc] sm:$0xf]
      %v794 = vld [vmem:[#allocation8 + $0x10] sm:$0xf]
      %v795 = vld [vmem:[#allocation8 + $0x14] sm:$0xf]
      %v796 = vld [vmem:[#allocation8 + $0x18] sm:$0xf]
      %v797 = vld [vmem:[#allocation8 + $0x1c] sm:$0xf]
      %v798 = vld [vmem:[#allocation8 + $0x20] sm:$0xf]
      %v799 = vld [vmem:[#allocation8 + $0x24] sm:$0xf]
      %v800 = vld [vmem:[#allocation8 + $0x28] sm:$0xf]
      %v801 = vld [vmem:[#allocation8 + $0x2c] sm:$0xf]
      %v802 = vld [vmem:[#allocation8 + $0x30] sm:$0xf]
      %v803 = vld [vmem:[#allocation8 + $0x34] sm:$0xf]
      %v804 = vld [vmem:[#allocation8 + $0x38] sm:$0xf]
      %v805 = vld [vmem:[#allocation8 + $0x3c] sm:$0xf]
      %v806 = vld [vmem:[%s4] sm:$0x1]
      %v808 = vlaneseq
      %v809 = vshrl.u32 %v808, 7
      %v810 = vsub.s32 0, %v809
      %v811 = vrot.slane %v806, %v810
      %v829 = vunpack.c.l.b16 %v790
      %v830 = vunpack.c.l.b16 %v791
      %v831 = vunpack.c.l.b16 %v792
      %v832 = vunpack.c.l.b16 %v793
      %v833 = vunpack.c.l.b16 %v794
      %v834 = vunpack.c.l.b16 %v795
      %v835 = vunpack.c.l.b16 %v796
      %v836 = vunpack.c.l.b16 %v797
      %v837 = vunpack.c.l.b16 %v798
      %v838 = vunpack.c.l.b16 %v799
      %v839 = vunpack.c.l.b16 %v800
      %v840 = vunpack.c.l.b16 %v801
      %v841 = vunpack.c.l.b16 %v802
      %v842 = vunpack.c.l.b16 %v803
      %v843 = vunpack.c.l.b16 %v804
      %v844 = vunpack.c.l.b16 %v805
      %v845 = vpack.c.b16 %v830, %v829
      %v846 = vpack.c.b16 %v832, %v831
      %v847 = vpack.c.b16 %v834, %v833
      %v848 = vpack.c.b16 %v836, %v835
      %v849 = vpack.c.b16 %v838, %v837
      %v850 = vpack.c.b16 %v840, %v839
      %v851 = vpack.c.b16 %v842, %v841
      %v852 = vpack.c.b16 %v844, %v843
      %861 = vmatprep.subr.bf16.mxu0 0
      %862 = vmatpush1.bf16.msra.mxu0 %v845
      %863 = vmatprep.subr.bf16.mxu0 0
      %864 = vmatpush1.bf16.msra.mxu0 %v846
      %865 = vmatprep.subr.bf16.mxu0 0
      %866 = vmatpush1.bf16.msra.mxu0 %v847
      %867 = vmatprep.subr.bf16.mxu0 0
      %868 = vmatpush1.bf16.msra.mxu0 %v848
      %869 = vmatprep.subr.bf16.mxu0 0
      %870 = vmatpush1.bf16.msra.mxu0 %v849
      %871 = vmatprep.subr.bf16.mxu0 0
      %872 = vmatpush1.bf16.msra.mxu0 %v850
      %873 = vmatprep.subr.bf16.mxu0 0
      %874 = vmatpush1.bf16.msra.mxu0 %v851
      %875 = vmatprep.subr.bf16.mxu0 0
      %876 = vmatpush1.bf16.msra.mxu0 %v852
      %877 = vmatprep.subr.bf16.mxu0 0
      %878 = vmatpush1.bf16.msra.mxu0 0
      %879 = vmatprep.subr.bf16.mxu0 0
      %880 = vmatpush1.bf16.msra.mxu0 0
      %881 = vmatprep.subr.bf16.mxu0 0
      %882 = vmatpush1.bf16.msra.mxu0 0
      %883 = vmatprep.subr.bf16.mxu0 0
      %884 = vmatpush1.bf16.msra.mxu0 0
      %885 = vmatprep.subr.bf16.mxu0 0
      %886 = vmatpush1.bf16.msra.mxu0 0
      %887 = vmatprep.subr.bf16.mxu0 0
      %888 = vmatpush1.bf16.msra.mxu0 0
      %889 = vmatprep.subr.bf16.mxu0 0
      %890 = vmatpush1.bf16.msra.mxu0 0
      %891 = vmatprep.subr.bf16.mxu0 0
      %892 = vmatpush1.bf16.msra.mxu0 0
      %893 = vmatprep.mubr.bf16.mxu0 0
      %894 = vmatmul.mubr.bf16.gmra.mrb[0].mxu0 %v789
      %v895 = vpop.f32.mrb[0].mxu0
      %v896 = vadd.f32 %v811, %v895
      %v897 = vpop.f32.mrb[0].mxu0
      %v898 = vpop.f32.mrb[0].mxu0
      %v899 = vadd.f32 %v811, %v898
      %v900 = vpop.f32.mrb[0].mxu0
      %901 = vdwg.mxu0
      %902 = vst [vmem:[#allocation9] sm:$0xff] %v896
      %903 = vst [vmem:[#allocation9 + $0x8] sm:$0xff] %v899
    $region41: #{tpu_custom_call.1} parent=1 // pred_fallthru
      _
    // Predicated region
    $region42: #{tpu_custom_call.1} parent=1 // pred_check
      _
    $region43: #{tpu_custom_call.1} parent=1 // pred_check_branch
      %905 = sbr.rel (0) target = $region45
    $region44: #{tpu_custom_call.1} parent=1 // pred_region
      %s907 = ssub.s32 256, 256
      %908 = vsyncadd [#allocation5], %s907
      %s909 = sshll.u32 [#allocation9], 4
      %s910 = int_to_ptr.vmem [resolvable:$true] %s909
      %915 = dma.vmem_to_hbm [thread:$0]  %s910, 256, %s5, [#allocation5], 128, 128, 8
    $region45: #{tpu_custom_call.1} parent=1 // pred_fallthru
      _
    // Predicated region
    $region46: #{tpu_custom_call.1} parent=1 // pred_check
      _
    $region47: #{tpu_custom_call.1} parent=1 // pred_check_branch
      %917 = sbr.rel (0) target = $region49
    $region48: #{tpu_custom_call.1} parent=1 // pred_region
      %918 = dma.done [#allocation5], 256
    $region49: #{tpu_custom_call.1} parent=1 // pred_fallthru
      _
    %919 = vsyncpa [#allocation4], 1
    %920 = vsyncpa [#allocation7], 1
    %921 = vsyncpa [#allocation5], 1

</llo_original>
